<compile_context>
chip_gen: v5e
topology: v5e:2x2
jax: 0.10.0
libtpu: 0.0.40
codegen_flags: <defaults>
</compile_context>

<pallas_src>
import jax
import jax.numpy as jnp
import numpy as np
from jax.experimental import pallas as pl
from jax.experimental.pallas import tpu as pltpu


def _round_up(x, m):
    return (x + m - 1) // m * m


def _make_avahead_kernel(negative_slope: float, dropout_p: float, training: bool):
    """Fused Linear -> LeakyReLU -> (Dropout) -> Linear kernel body."""
    keep_p = 1.0 - float(dropout_p)
    use_dropout = bool(training) and float(dropout_p) > 0.0
    if use_dropout:
        assert keep_p > 0.0, "dropout_p must be < 1"
        thresh = np.uint32(min(int(round(keep_p * 2.0 ** 32)), 2 ** 32 - 1))
        inv_keep = 1.0 / keep_p

    def _compute(x, w1, b1, w2, b2, bits):
        # First matmul on the MXU, accumulate in f32.
        h = jnp.dot(x, w1, preferred_element_type=jnp.float32)
        h = h + b1                                        # bias in f32
        h = jnp.where(h >= 0.0, h, h * negative_slope)    # LeakyReLU (VPU)
        if use_dropout:
            # Inverted dropout via integer threshold compare (no float convert).
            keep = bits < thresh
            h = jnp.where(keep, h * inv_keep, 0.0)
        h = h.astype(w2.dtype)                            # bf16 for 2nd MXU pass
        y = jnp.dot(h, w2, preferred_element_type=jnp.float32)
        return y + b2

    if use_dropout:
        def kernel(x_ref, w1_ref, b1_ref, w2_ref, b2_ref, bits_ref, o_ref):
            o_ref[...] = _compute(x_ref[...], w1_ref[...], b1_ref[...],
                                  w2_ref[...], b2_ref[...],
                                  bits_ref[...]).astype(o_ref.dtype)
    else:
        def kernel(x_ref, w1_ref, b1_ref, w2_ref, b2_ref, o_ref):
            o_ref[...] = _compute(x_ref[...], w1_ref[...], b1_ref[...],
                                  w2_ref[...], b2_ref[...],
                                  None).astype(o_ref.dtype)
    return kernel


def ava_head_logits(x, w1, b1, w2, b2, *, dropout_p=0.6, training=False,
                    rng_key=None, bm=256, negative_slope=0.01,
                    compute_dtype=jnp.bfloat16):
    """Pallas AVAHead.logits forward.

    x:  [B, in_dim]           (BERT pooled features)
    w1: [in_dim, feat_dim]    (pre-transposed vs. nn.Linear storage)
    b1: [feat_dim]
    w2: [feat_dim, n_way]     (pre-transposed)
    b2: [n_way]
    returns logits [B, n_way] in float32.
    """
    B, in_dim = x.shape
    feat_dim = w1.shape[1]
    n_way = w2.shape[1]

    # ---- layout / padding --------------------------------------------------
    n_pad = _round_up(n_way, 128)                 # lane-dense output slab
    bm_eff = _round_up(min(int(bm), _round_up(B, 8)), 8)
    B_pad = _round_up(B, bm_eff)

    x_p = x if B_pad == B else jnp.pad(x, ((0, B_pad - B), (0, 0)))
    x_p = x_p.astype(compute_dtype)
    w1_c = w1.astype(compute_dtype)
    w2_p, b2_p = w2, b2
    if n_pad != n_way:
        w2_p = jnp.pad(w2, ((0, 0), (0, n_pad - n_way)))
        b2_p = jnp.pad(b2, (0, n_pad - n_way))
    w2_c = w2_p.astype(compute_dtype)
    b1_r = b1.reshape(1, feat_dim).astype(jnp.float32)
    b2_r = b2_p.reshape(1, n_pad).astype(jnp.float32)

    use_dropout = bool(training) and float(dropout_p) > 0.0
    inputs = [x_p, w1_c, b1_r, w2_c, b2_r]
    in_specs = [
        pl.BlockSpec((bm_eff, in_dim), lambda i: (i, 0)),
        pl.BlockSpec((in_dim, feat_dim), lambda i: (0, 0)),   # weight-resident
        pl.BlockSpec((1, feat_dim), lambda i: (0, 0)),
        pl.BlockSpec((feat_dim, n_pad), lambda i: (0, 0)),
        pl.BlockSpec((1, n_pad), lambda i: (0, 0)),
    ]
    if use_dropout:
        if rng_key is None:
            raise ValueError("training-mode dropout requires rng_key")
        bits = jax.random.bits(rng_key, (B_pad, feat_dim), dtype=jnp.uint32)
        inputs.append(bits)
        in_specs.append(pl.BlockSpec((bm_eff, feat_dim), lambda i: (i, 0)))

    # ---- VMEM / cost bookkeeping -------------------------------------------
    csize = np.dtype(compute_dtype).itemsize
    tile_bytes = (bm_eff * in_dim * csize            # x tile
                  + in_dim * feat_dim * csize        # W1
                  + feat_dim * 4                     # b1
                  + feat_dim * n_pad * csize         # W2
                  + n_pad * 4                        # b2
                  + bm_eff * n_pad * 4               # out tile
                  + bm_eff * feat_dim * 4)           # f32 intermediate h
    if use_dropout:
        tile_bytes += bm_eff * feat_dim * 4
    vmem_est = 2 * tile_bytes + (4 << 20)
    # TODO(synk): add K/N grid tiling with an f32 accumulator scratch for layers
    # whose full weights do not fit one VMEM block (v7x has only 64 MiB VMEM).
    assert vmem_est < (60 << 20), "weights too large for single-block VMEM"
    vmem_limit = int(min(max(vmem_est, 32 << 20), 60 << 20))

    bytes_accessed = sum(int(a.size) * a.dtype.itemsize for a in inputs)
    bytes_accessed += B_pad * n_pad * 4
    flops = 2 * B_pad * in_dim * feat_dim + 2 * B_pad * feat_dim * n_pad

    kernel = _make_avahead_kernel(float(negative_slope), float(dropout_p),
                                  bool(training))

    out = pl.pallas_call(
        kernel,
        out_shape=jax.ShapeDtypeStruct((B_pad, n_pad), jnp.float32),
        grid_spec=pltpu.PrefetchScalarGridSpec(
            num_scalar_prefetch=0,
            grid=(B_pad // bm_eff,),
            in_specs=in_specs,
            out_specs=pl.BlockSpec((bm_eff, n_pad), lambda i: (i, 0)),
        ),
        compiler_params=pltpu.CompilerParams(
            dimension_semantics=("parallel",),
            vmem_limit_bytes=vmem_limit),
        cost_estimate=pl.CostEstimate(
            flops=int(flops), transcendentals=0,
            bytes_accessed=int(bytes_accessed)),
    )(*inputs)

    return out[:B, :n_way]


def encoder_forward(feat, label_ids, params, *, dropout_p=0.6, training=False,
                    rng_key=None):
    """Pallas equivalent of Encoder.forward on a precomputed BERT feature.

    Returns (logits, 0.0, 0.0, label_ids) matching the PyTorch module.
    """
    # TODO(synk): BertEncoder (pretrained bert-base-uncased) has no in-script
    # Pallas equivalent; `feat` stands in for its pooled output.
    # TODO(synk): ConvexSampler's data-dependent numpy rejection-sampling loop is
    # host-side control flow; only the mode=None path (no sampling) is covered.
    logits = ava_head_logits(feat, params["w1"], params["b1"],
                             params["w2"], params["b2"],
                             dropout_p=dropout_p, training=training,
                             rng_key=rng_key)
    return logits, 0.0, 0.0, label_ids


def init_avahead_params(key, in_dim, feat_dim, n_way, dtype=jnp.float32):
    """nn.Linear-style init (U(+/- 1/sqrt(fan_in))), weights stored pre-transposed."""
    k1, k2, k3, k4 = jax.random.split(key, 4)
    bnd1 = 1.0 / (in_dim ** 0.5)
    bnd2 = 1.0 / (feat_dim ** 0.5)
    return dict(
        w1=jax.random.uniform(k1, (in_dim, feat_dim), dtype, -bnd1, bnd1),
        b1=jax.random.uniform(k2, (feat_dim,), dtype, -bnd1, bnd1),
        w2=jax.random.uniform(k3, (feat_dim, n_way), dtype, -bnd2, bnd2),
        b2=jax.random.uniform(k4, (n_way,), dtype, -bnd2, bnd2),
    )


if __name__ == "__main__":
    B, IN_DIM, FEAT_DIM, N_WAY = 16, 256, 512, 7
    DROPOUT, SLOPE = 0.6, 0.01

    key = jax.random.PRNGKey(0)
    k_x, k_p = jax.random.split(key)
    feat = jax.random.normal(k_x, (B, IN_DIM), jnp.float32)   # stand-in for BERT pooled output
    label_ids = jnp.arange(B, dtype=jnp.int32) % N_WAY
    params = init_avahead_params(k_p, IN_DIM, FEAT_DIM, N_WAY)

    def _bf(a):  # mirror the kernel's bf16 MXU-input rounding in the reference
        return a.astype(jnp.bfloat16).astype(jnp.float32)

    # ---- eval mode (dropout is identity) ------------------------------------
    logits, mean, log_var, lids = encoder_forward(
        feat, label_ids, params, dropout_p=DROPOUT, training=False)
    logits = jax.block_until_ready(logits)
    assert logits.shape == (B, N_WAY)
    h_ref = _bf(feat) @ _bf(params["w1"]) + params["b1"]
    h_ref = jnp.where(h_ref >= 0.0, h_ref, SLOPE * h_ref)
    ref_eval = _bf(h_ref) @ _bf(params["w2"]) + params["b2"]
    assert jnp.allclose(logits, ref_eval, atol=5e-2, rtol=5e-2), "eval mismatch"

    # ---- training mode (dropout active, bits generated in the wrapper) ------
    drop_key = jax.random.PRNGKey(1234)
    logits_tr = ava_head_logits(
        feat, params["w1"], params["b1"], params["w2"], params["b2"],
        dropout_p=DROPOUT, training=True, rng_key=drop_key)
    logits_tr = jax.block_until_ready(logits_tr)
    assert logits_tr.shape == (B, N_WAY)

    keep_p = 1.0 - DROPOUT
    thresh = np.uint32(int(round(keep_p * 2.0 ** 32)))
    bits = jax.random.bits(drop_key, (B, FEAT_DIM), dtype=jnp.uint32)  # B == padded B here
    h_tr = _bf(feat) @ _bf(params["w1"]) + params["b1"]
    h_tr = jnp.where(h_tr >= 0.0, h_tr, SLOPE * h_tr)
    h_tr = jnp.where(bits < thresh, h_tr / keep_p, 0.0)
    ref_tr = _bf(h_tr) @ _bf(params["w2"]) + params["b2"]
    assert jnp.allclose(logits_tr, ref_tr, atol=5e-2, rtol=5e-2), "train mismatch"

    print("KERNEL_OK")
</pallas_src>

<mosaic_0001>
module attributes {stable_mosaic.version = 11 : i64} {
  func.func @kernel(%arg0: i32, %arg1: memref<16x256xbf16, #tpu.memory_space<vmem>>, %arg2: memref<256x512xbf16, #tpu.memory_space<vmem>>, %arg3: memref<1x512xf32, #tpu.memory_space<vmem>>, %arg4: memref<512x128xbf16, #tpu.memory_space<vmem>>, %arg5: memref<1x128xf32, #tpu.memory_space<vmem>>, %arg6: memref<16x128xf32, #tpu.memory_space<vmem>>) attributes {dimension_semantics = [#tpu.dimension_semantics<parallel>], iteration_bounds = array<i64: 1>, scalar_prefetch = 0 : i64, scratch_operands = 0 : i64, tpu.core_type = #tpu.core_type<tc>, window_params = [{transform_indices = @transform_0, window_bounds = array<i64: 16, 256>}, {pipeline_mode = #tpu.pipeline_mode<synchronous>, transform_indices = @transform_1, window_bounds = array<i64: 256, 512>}, {pipeline_mode = #tpu.pipeline_mode<synchronous>, transform_indices = @transform_2, window_bounds = array<i64: 1, 512>}, {pipeline_mode = #tpu.pipeline_mode<synchronous>, transform_indices = @transform_3, window_bounds = array<i64: 512, 128>}, {pipeline_mode = #tpu.pipeline_mode<synchronous>, transform_indices = @transform_4, window_bounds = array<i64: 1, 128>}, {transform_indices = @transform_5, window_bounds = array<i64: 16, 128>}]} {
    %c0 = arith.constant 0 : index
    %c0_0 = arith.constant 0 : index
    %0 = vector.load %arg1[%c0, %c0_0] : memref<16x256xbf16, #tpu.memory_space<vmem>>, vector<16x256xbf16>
    %c0_1 = arith.constant 0 : index
    %c0_2 = arith.constant 0 : index
    %1 = vector.load %arg2[%c0_1, %c0_2] : memref<256x512xbf16, #tpu.memory_space<vmem>>, vector<256x512xbf16>
    %c0_3 = arith.constant 0 : index
    %c0_4 = arith.constant 0 : index
    %2 = vector.load %arg3[%c0_3, %c0_4] : memref<1x512xf32, #tpu.memory_space<vmem>>, vector<1x512xf32>
    %c0_5 = arith.constant 0 : index
    %c0_6 = arith.constant 0 : index
    %3 = vector.load %arg4[%c0_5, %c0_6] : memref<512x128xbf16, #tpu.memory_space<vmem>>, vector<512x128xbf16>
    %c0_7 = arith.constant 0 : index
    %c0_8 = arith.constant 0 : index
    %4 = vector.load %arg5[%c0_7, %c0_8] : memref<1x128xf32, #tpu.memory_space<vmem>>, vector<1x128xf32>
    %cst = arith.constant dense<0.000000e+00> : vector<16x512xf32>
    %5 = tpu.matmul %0, %1, %cst {dimension_numbers = #tpu.dot_dimension_numbers<[1], [0], [0], [1], [0, 0, 1, 1], [], []>} : vector<16x256xbf16>, vector<256x512xbf16>, vector<16x512xf32> -> vector<16x512xf32>
    %6 = vector.broadcast %2 : vector<1x512xf32> to vector<16x512xf32>
    %7 = arith.addf %5, %6 : vector<16x512xf32>
    %cst_9 = arith.constant 0.000000e+00 : f32
    %8 = vector.broadcast %cst_9 : f32 to vector<16x512xf32>
    %9 = arith.cmpf oge, %7, %8 : vector<16x512xf32>
    %cst_10 = arith.constant 0.00999999977 : f32
    %10 = vector.broadcast %cst_10 : f32 to vector<16x512xf32>
    %11 = arith.mulf %7, %10 : vector<16x512xf32>
    %12 = arith.select %9, %7, %11 : vector<16x512xi1>, vector<16x512xf32>
    %13 = arith.truncf %12 : vector<16x512xf32> to vector<16x512xbf16>
    %cst_11 = arith.constant dense<0.000000e+00> : vector<16x128xf32>
    %14 = tpu.matmul %13, %3, %cst_11 {dimension_numbers = #tpu.dot_dimension_numbers<[1], [0], [0], [1], [0, 0, 1, 1], [], []>} : vector<16x512xbf16>, vector<512x128xbf16>, vector<16x128xf32> -> vector<16x128xf32>
    %15 = vector.broadcast %4 : vector<1x128xf32> to vector<16x128xf32>
    %16 = arith.addf %14, %15 : vector<16x128xf32>
    %c0_12 = arith.constant 0 : index
    %c0_13 = arith.constant 0 : index
    %17 = vector.load %arg6[%c0_12, %c0_13] : memref<16x128xf32, #tpu.memory_space<vmem>>, vector<16x128xf32>
    tpu.vector_store %arg6[%c0_12, %c0_13], %16 {strides = array<i32>} : memref<16x128xf32, #tpu.memory_space<vmem>>, vector<16x128xf32>,
    return
  }
  func.func @transform_0(%arg0: i32) -> (i32, i32) {
    %c0_i32 = arith.constant 0 : i32
    %c0_i32_0 = arith.constant 0 : i32
    return %arg0, %c0_i32 : i32, i32
  }
  func.func @transform_1(%arg0: i32) -> (i32, i32) {
    %c0_i32 = arith.constant 0 : i32
    %c0_i32_0 = arith.constant 0 : i32
    %c0_i32_1 = arith.constant 0 : i32
    return %c0_i32, %c0_i32_0 : i32, i32
  }
  func.func @transform_2(%arg0: i32) -> (i32, i32) {
    %c0_i32 = arith.constant 0 : i32
    %c0_i32_0 = arith.constant 0 : i32
    %c0_i32_1 = arith.constant 0 : i32
    return %c0_i32, %c0_i32_0 : i32, i32
  }
  func.func @transform_3(%arg0: i32) -> (i32, i32) {
    %c0_i32 = arith.constant 0 : i32
    %c0_i32_0 = arith.constant 0 : i32
    %c0_i32_1 = arith.constant 0 : i32
    return %c0_i32, %c0_i32_0 : i32, i32
  }
  func.func @transform_4(%arg0: i32) -> (i32, i32) {
    %c0_i32 = arith.constant 0 : i32
    %c0_i32_0 = arith.constant 0 : i32
    %c0_i32_1 = arith.constant 0 : i32
    return %c0_i32, %c0_i32_0 : i32, i32
  }
  func.func @transform_5(%arg0: i32) -> (i32, i32) {
    %c0_i32 = arith.constant 0 : i32
    %c0_i32_0 = arith.constant 0 : i32
    return %arg0, %c0_i32 : i32, i32
  }
}

</mosaic_0001>

<llo_original>
// kernel: tpu_custom_call.1
$region0: #{tpu_custom_call.1}
  #allocation0 [shape = 'u32[]', space=smem, size = 0x4, offset = 0x4, fixed_abs, tag = 'smem constant byte address 0x4 - core index']
  #allocation1 [shape = 'u32[72,128]{1,0:T(1,128)}', space=vmem, size = 0x9000, scoped, tag = 'internal scratch']
  %s0 = inlined_call_operand.hbm [shape: bf16[16,256], index: 0, kind: input, shape index: {}]
  %s1 = inlined_call_operand.hbm [shape: bf16[256,512], index: 1, kind: input, shape index: {}]
  %s2 = inlined_call_operand.hbm [shape: f32[1,512], index: 2, kind: input, shape index: {}]
  %s3 = inlined_call_operand.hbm [shape: bf16[512,128], index: 3, kind: input, shape index: {}]
  %s4 = inlined_call_operand.vmem [shape: f32[1,128], index: 4, kind: input, shape index: {}]
  %s5 = inlined_call_operand.hbm [shape: f32[16,128], index: 5, kind: output, shape index: {}]
  %s6 = sld [smem:[#allocation0]]
  $region46: #{tpu_custom_call.1} parent=0
    _
  %s8 = ssub.s32 1, %s6
  %s9 = scalar_select 0, %s8, %s6
  $region1: #{tpu_custom_call.1} parent=0
    #allocation2 [shape = 'u8[8192]{0}', space=vmem, size = 0x2000, scoped, tag = 'input window, operand 0, single buffered']
    #allocation3 [shape = 's32[1]{0}', space=sflag, size = 0x4, scoped, tag = 'scoped memory for tpu_custom_call.1']
    #allocation4 [shape = 's32[1]{0}', space=sflag, size = 0x4, scoped, tag = 'scoped memory for tpu_custom_call.1']
    #allocation5 [shape = 'u8[262144]{0}', space=vmem, size = 0x40000, scoped, tag = 'input window, operand 1, single buffered']
    #allocation6 [shape = 's32[1]{0}', space=sflag, size = 0x4, scoped, tag = 'scoped memory for tpu_custom_call.1']
    #allocation7 [shape = 'u8[2048]{0}', space=vmem, size = 0x800, scoped, tag = 'input window, operand 2, single buffered']
    #allocation8 [shape = 'u8[131072]{0}', space=vmem, size = 0x20000, scoped, tag = 'input window, operand 3, single buffered']
    #allocation9 [shape = 's32[1]{0}', space=sflag, size = 0x4, scoped, tag = 'scoped memory for tpu_custom_call.1']
    #allocation10 [shape = 'u8[8192]{0}', space=vmem, size = 0x2000, scoped, tag = 'output window, operand 0, single buffered']
    %10 = vsyncpa [#allocation3], 0
    %11 = vsyncpa [#allocation6], 0
    %12 = vsyncpa [#allocation9], 0
    %13 = vsyncpa [#allocation4], 0
    // Predicated region
    $region2: #{tpu_custom_call.1} parent=1 // pred_check
      _
    $region3: #{tpu_custom_call.1} parent=1 // pred_check_branch
      %15 = sbr.rel (0) target = $region5
    $region4: #{tpu_custom_call.1} parent=1 // pred_region
      %17 = vsyncadd [#allocation3], 0
      %s18 = sshll.u32 %s0, 4
      %s19 = int_to_ptr.hbm [resolvable:$true] %s18
      %s20 = sshll.u32 [#allocation2], 4
      %s21 = int_to_ptr.vmem [resolvable:$true] %s20
      %26 = dma.hbm_to_vmem [thread:$0]  %s19, 256, %s21, [#allocation3], 128, 128, 8
    $region5: #{tpu_custom_call.1} parent=1 // pred_fallthru
      _
    // Predicated region
    $region6: #{tpu_custom_call.1} parent=1 // pred_check
      _
    $region7: #{tpu_custom_call.1} parent=1 // pred_check_branch
      %28 = sbr.rel (0) target = $region9
    $region8: #{tpu_custom_call.1} parent=1 // pred_region
      %30 = vsyncadd [#allocation6], 0
      %s31 = sshll.u32 %s1, 4
      %s32 = int_to_ptr.hbm [resolvable:$true] %s31
      %s33 = sshll.u32 [#allocation5], 4
      %s34 = int_to_ptr.vmem [resolvable:$true] %s33
      %39 = dma.hbm_to_vmem [thread:$0]  %s32, 8192, %s34, [#allocation6], 256, 256, 16
    $region9: #{tpu_custom_call.1} parent=1 // pred_fallthru
      _
    // Predicated region
    $region10: #{tpu_custom_call.1} parent=1 // pred_check
      _
    $region11: #{tpu_custom_call.1} parent=1 // pred_check_branch
      %41 = sbr.rel (0) target = $region13
    $region12: #{tpu_custom_call.1} parent=1 // pred_region
      %43 = vsyncadd [#allocation6], 0
      %s45 = sshll.u32 %s2, 4
      %s46 = int_to_ptr.hbm [resolvable:$true] %s45
      %s47 = sshll.u32 [#allocation7], 4
      %s48 = int_to_ptr.vmem [resolvable:$true] %s47
      %50 = dma.hbm_to_vmem [thread:$0]  %s46, 64, %s48, [#allocation6]
    $region13: #{tpu_custom_call.1} parent=1 // pred_fallthru
      _
    // Predicated region
    $region14: #{tpu_custom_call.1} parent=1 // pred_check
      _
    $region15: #{tpu_custom_call.1} parent=1 // pred_check_branch
      %52 = sbr.rel (0) target = $region17
    $region16: #{tpu_custom_call.1} parent=1 // pred_region
      %54 = vsyncadd [#allocation9], 0
      %s55 = sshll.u32 %s3, 4
      %s56 = int_to_ptr.hbm [resolvable:$true] %s55
      %s57 = sshll.u32 [#allocation8], 4
      %s58 = int_to_ptr.vmem [resolvable:$true] %s57
      %63 = dma.hbm_to_vmem [thread:$0]  %s56, 4096, %s58, [#allocation9], 64, 64, 4
    $region17: #{tpu_custom_call.1} parent=1 // pred_fallthru
      _
    // Predicated region
    $region18: #{tpu_custom_call.1} parent=1 // pred_check
      _
    $region19: #{tpu_custom_call.1} parent=1 // pred_check_branch
      %65 = sbr.rel (0) target = $region21
    $region20: #{tpu_custom_call.1} parent=1 // pred_region
      _
    $region21: #{tpu_custom_call.1} parent=1 // pred_fallthru
      _
    // Predicated region
    $region22: #{tpu_custom_call.1} parent=1 // pred_check
      _
    $region23: #{tpu_custom_call.1} parent=1 // pred_check_branch
      %67 = sbr.rel (0) target = $region25
    $region24: #{tpu_custom_call.1} parent=1 // pred_region
      %69 = dma.done [#allocation3], 256
    $region25: #{tpu_custom_call.1} parent=1 // pred_fallthru
      _
    // Predicated region
    $region26: #{tpu_custom_call.1} parent=1 // pred_check
      _
    $region27: #{tpu_custom_call.1} parent=1 // pred_check_branch
      %71 = sbr.rel (0) target = $region29
    $region28: #{tpu_custom_call.1} parent=1 // pred_region
      %73 = dma.done [#allocation6], 8192
    $region29: #{tpu_custom_call.1} parent=1 // pred_fallthru
      _
    // Predicated region
    $region30: #{tpu_custom_call.1} parent=1 // pred_check
      _
    $region31: #{tpu_custom_call.1} parent=1 // pred_check_branch
      %75 = sbr.rel (0) target = $region33
    $region32: #{tpu_custom_call.1} parent=1 // pred_region
      %77 = dma.done [#allocation6], 64
    $region33: #{tpu_custom_call.1} parent=1 // pred_fallthru
      _
    // Predicated region
    $region34: #{tpu_custom_call.1} parent=1 // pred_check
      _
    $region35: #{tpu_custom_call.1} parent=1 // pred_check_branch
      %79 = sbr.rel (0) target = $region37
    $region36: #{tpu_custom_call.1} parent=1 // pred_region
      %81 = dma.done [#allocation9], 4096
    $region37: #{tpu_custom_call.1} parent=1 // pred_fallthru
      _
    %v82 = vld [vmem:[#allocation2] sm:$0xff]
    %v83 = vld [vmem:[#allocation2 + $0x8] sm:$0xff]
    %v84 = vld [vmem:[#allocation5] sm:$0xff]
    %v85 = vld [vmem:[#allocation5 + $0x8] sm:$0xff]
    %v86 = vld [vmem:[#allocation5 + $0x10] sm:$0xff]
    %v87 = vld [vmem:[#allocation5 + $0x18] sm:$0xff]
    %v88 = vld [vmem:[#allocation5 + $0x20] sm:$0xff]
    %v89 = vld [vmem:[#allocation5 + $0x28] sm:$0xff]
    %v90 = vld [vmem:[#allocation5 + $0x30] sm:$0xff]
    %v91 = vld [vmem:[#allocation5 + $0x38] sm:$0xff]
    %v92 = vld [vmem:[#allocation5 + $0x40] sm:$0xff]
    %v93 = vld [vmem:[#allocation5 + $0x48] sm:$0xff]
    %v94 = vld [vmem:[#allocation5 + $0x50] sm:$0xff]
    %v95 = vld [vmem:[#allocation5 + $0x58] sm:$0xff]
    %v96 = vld [vmem:[#allocation5 + $0x60] sm:$0xff]
    %v97 = vld [vmem:[#allocation5 + $0x68] sm:$0xff]
    %v98 = vld [vmem:[#allocation5 + $0x70] sm:$0xff]
    %v99 = vld [vmem:[#allocation5 + $0x78] sm:$0xff]
    %v100 = vld [vmem:[#allocation5 + $0x80] sm:$0xff]
    %v101 = vld [vmem:[#allocation5 + $0x88] sm:$0xff]
    %v102 = vld [vmem:[#allocation5 + $0x90] sm:$0xff]
    %v103 = vld [vmem:[#allocation5 + $0x98] sm:$0xff]
    %v104 = vld [vmem:[#allocation5 + $0xa0] sm:$0xff]
    %v105 = vld [vmem:[#allocation5 + $0xa8] sm:$0xff]
    %v106 = vld [vmem:[#allocation5 + $0xb0] sm:$0xff]
    %v107 = vld [vmem:[#allocation5 + $0xb8] sm:$0xff]
    %v108 = vld [vmem:[#allocation5 + $0xc0] sm:$0xff]
    %v109 = vld [vmem:[#allocation5 + $0xc8] sm:$0xff]
    %v110 = vld [vmem:[#allocation5 + $0xd0] sm:$0xff]
    %v111 = vld [vmem:[#allocation5 + $0xd8] sm:$0xff]
    %v112 = vld [vmem:[#allocation5 + $0xe0] sm:$0xff]
    %v113 = vld [vmem:[#allocation5 + $0xe8] sm:$0xff]
    %v114 = vld [vmem:[#allocation5 + $0xf0] sm:$0xff]
    %v115 = vld [vmem:[#allocation5 + $0xf8] sm:$0xff]
    %v116 = vld [vmem:[#allocation5 + $0x100] sm:$0xff]
    %v117 = vld [vmem:[#allocation5 + $0x108] sm:$0xff]
    %v118 = vld [vmem:[#allocation5 + $0x110] sm:$0xff]
    %v119 = vld [vmem:[#allocation5 + $0x118] sm:$0xff]
    %v120 = vld [vmem:[#allocation5 + $0x120] sm:$0xff]
    %v121 = vld [vmem:[#allocation5 + $0x128] sm:$0xff]
    %v122 = vld [vmem:[#allocation5 + $0x130] sm:$0xff]
    %v123 = vld [vmem:[#allocation5 + $0x138] sm:$0xff]
    %v124 = vld [vmem:[#allocation5 + $0x140] sm:$0xff]
    %v125 = vld [vmem:[#allocation5 + $0x148] sm:$0xff]
    %v126 = vld [vmem:[#allocation5 + $0x150] sm:$0xff]
    %v127 = vld [vmem:[#allocation5 + $0x158] sm:$0xff]
    %v128 = vld [vmem:[#allocation5 + $0x160] sm:$0xff]
    %v129 = vld [vmem:[#allocation5 + $0x168] sm:$0xff]
    %v130 = vld [vmem:[#allocation5 + $0x170] sm:$0xff]
    %v131 = vld [vmem:[#allocation5 + $0x178] sm:$0xff]
    %v132 = vld [vmem:[#allocation5 + $0x180] sm:$0xff]
    %v133 = vld [vmem:[#allocation5 + $0x188] sm:$0xff]
    %v134 = vld [vmem:[#allocation5 + $0x190] sm:$0xff]
    %v135 = vld [vmem:[#allocation5 + $0x198] sm:$0xff]
    %v136 = vld [vmem:[#allocation5 + $0x1a0] sm:$0xff]
    %v137 = vld [vmem:[#allocation5 + $0x1a8] sm:$0xff]
    %v138 = vld [vmem:[#allocation5 + $0x1b0] sm:$0xff]
    %v139 = vld [vmem:[#allocation5 + $0x1b8] sm:$0xff]
    %v140 = vld [vmem:[#allocation5 + $0x1c0] sm:$0xff]
    %v141 = vld [vmem:[#allocation5 + $0x1c8] sm:$0xff]
    %v142 = vld [vmem:[#allocation5 + $0x1d0] sm:$0xff]
    %v143 = vld [vmem:[#allocation5 + $0x1d8] sm:$0xff]
    %v144 = vld [vmem:[#allocation5 + $0x1e0] sm:$0xff]
    %v145 = vld [vmem:[#allocation5 + $0x1e8] sm:$0xff]
    %v146 = vld [vmem:[#allocation5 + $0x1f0] sm:$0xff]
    %v147 = vld [vmem:[#allocation5 + $0x1f8] sm:$0xff]
    %v148 = vld [vmem:[#allocation7] sm:$0xf]
    %v149 = vld [vmem:[#allocation8] sm:$0xf]
    %v150 = vld [vmem:[#allocation8 + $0x4] sm:$0xf]
    %v151 = vld [vmem:[#allocation8 + $0x8] sm:$0xf]
    %v152 = vld [vmem:[#allocation8 + $0xc] sm:$0xf]
    %v153 = vld [vmem:[#allocation8 + $0x10] sm:$0xf]
    %v154 = vld [vmem:[#allocation8 + $0x14] sm:$0xf]
    %v155 = vld [vmem:[#allocation8 + $0x18] sm:$0xf]
    %v156 = vld [vmem:[#allocation8 + $0x1c] sm:$0xf]
    %v157 = vld [vmem:[#allocation8 + $0x20] sm:$0xf]
    %v158 = vld [vmem:[#allocation8 + $0x24] sm:$0xf]
    %v159 = vld [vmem:[#allocation8 + $0x28] sm:$0xf]
    %v160 = vld [vmem:[#allocation8 + $0x2c] sm:$0xf]
    %v161 = vld [vmem:[#allocation8 + $0x30] sm:$0xf]
    %v162 = vld [vmem:[#allocation8 + $0x34] sm:$0xf]
    %v163 = vld [vmem:[#allocation8 + $0x38] sm:$0xf]
    %v164 = vld [vmem:[#allocation8 + $0x3c] sm:$0xf]
    %v165 = vld [vmem:[#allocation8 + $0x40] sm:$0xf]
    %v166 = vld [vmem:[#allocation8 + $0x44] sm:$0xf]
    %v167 = vld [vmem:[#allocation8 + $0x48] sm:$0xf]
    %v168 = vld [vmem:[#allocation8 + $0x4c] sm:$0xf]
    %v169 = vld [vmem:[#allocation8 + $0x50] sm:$0xf]
    %v170 = vld [vmem:[#allocation8 + $0x54] sm:$0xf]
    %v171 = vld [vmem:[#allocation8 + $0x58] sm:$0xf]
    %v172 = vld [vmem:[#allocation8 + $0x5c] sm:$0xf]
    %v173 = vld [vmem:[#allocation8 + $0x60] sm:$0xf]
    %v174 = vld [vmem:[#allocation8 + $0x64] sm:$0xf]
    %v175 = vld [vmem:[#allocation8 + $0x68] sm:$0xf]
    %v176 = vld [vmem:[#allocation8 + $0x6c] sm:$0xf]
    %v177 = vld [vmem:[#allocation8 + $0x70] sm:$0xf]
    %v178 = vld [vmem:[#allocation8 + $0x74] sm:$0xf]
    %v179 = vld [vmem:[#allocation8 + $0x78] sm:$0xf]
    %v180 = vld [vmem:[#allocation8 + $0x7c] sm:$0xf]
    %v181 = vld [vmem:[#allocation8 + $0x80] sm:$0xf]
    %v182 = vld [vmem:[#allocation8 + $0x84] sm:$0xf]
    %v183 = vld [vmem:[#allocation8 + $0x88] sm:$0xf]
    %v184 = vld [vmem:[#allocation8 + $0x8c] sm:$0xf]
    %v185 = vld [vmem:[#allocation8 + $0x90] sm:$0xf]
    %v186 = vld [vmem:[#allocation8 + $0x94] sm:$0xf]
    %v187 = vld [vmem:[#allocation8 + $0x98] sm:$0xf]
    %v188 = vld [vmem:[#allocation8 + $0x9c] sm:$0xf]
    %v189 = vld [vmem:[#allocation8 + $0xa0] sm:$0xf]
    %v190 = vld [vmem:[#allocation8 + $0xa4] sm:$0xf]
    %v191 = vld [vmem:[#allocation8 + $0xa8] sm:$0xf]
    %v192 = vld [vmem:[#allocation8 + $0xac] sm:$0xf]
    %v193 = vld [vmem:[#allocation8 + $0xb0] sm:$0xf]
    %v194 = vld [vmem:[#allocation8 + $0xb4] sm:$0xf]
    %v195 = vld [vmem:[#allocation8 + $0xb8] sm:$0xf]
    %v196 = vld [vmem:[#allocation8 + $0xbc] sm:$0xf]
    %v197 = vld [vmem:[#allocation8 + $0xc0] sm:$0xf]
    %v198 = vld [vmem:[#allocation8 + $0xc4] sm:$0xf]
    %v199 = vld [vmem:[#allocation8 + $0xc8] sm:$0xf]
    %v200 = vld [vmem:[#allocation8 + $0xcc] sm:$0xf]
    %v201 = vld [vmem:[#allocation8 + $0xd0] sm:$0xf]
    %v202 = vld [vmem:[#allocation8 + $0xd4] sm:$0xf]
    %v203 = vld [vmem:[#allocation8 + $0xd8] sm:$0xf]
    %v204 = vld [vmem:[#allocation8 + $0xdc] sm:$0xf]
    %v205 = vld [vmem:[#allocation8 + $0xe0] sm:$0xf]
    %v206 = vld [vmem:[#allocation8 + $0xe4] sm:$0xf]
    %v207 = vld [vmem:[#allocation8 + $0xe8] sm:$0xf]
    %v208 = vld [vmem:[#allocation8 + $0xec] sm:$0xf]
    %v209 = vld [vmem:[#allocation8 + $0xf0] sm:$0xf]
    %v210 = vld [vmem:[#allocation8 + $0xf4] sm:$0xf]
    %v211 = vld [vmem:[#allocation8 + $0xf8] sm:$0xf]
    %v212 = vld [vmem:[#allocation8 + $0xfc] sm:$0xf]
    %v213 = vld [vmem:[%s4] sm:$0x1]
    %v215 = vperm.slane %v148, 0
    %v216 = vperm.slane %v148, 1
    %v217 = vperm.slane %v148, 2
    %v218 = vperm.slane %v148, 3
    %v225 = vunpack.c.l.b16 %v82
    %v226 = vunpack.c.h.b16 %v82
    %v227 = vunpack.c.l.b16 %v83
    %v228 = vunpack.c.h.b16 %v83
    %v229 = vpack.c.b16 %v227, %v225
    %v230 = vpack.c.b16 %v228, %v226
    %v297 = vunpack.c.l.b16 %v84
    %v298 = vunpack.c.h.b16 %v84
    %v299 = vunpack.c.l.b16 %v85
    %v300 = vunpack.c.h.b16 %v85
    %v301 = vunpack.c.l.b16 %v86
    %v302 = vunpack.c.h.b16 %v86
    %v303 = vunpack.c.l.b16 %v87
    %v304 = vunpack.c.h.b16 %v87
    %v305 = vunpack.c.l.b16 %v88
    %v306 = vunpack.c.h.b16 %v88
    %v307 = vunpack.c.l.b16 %v89
    %v308 = vunpack.c.h.b16 %v89
    %v309 = vunpack.c.l.b16 %v90
    %v310 = vunpack.c.h.b16 %v90
    %v311 = vunpack.c.l.b16 %v91
    %v312 = vunpack.c.h.b16 %v91
    %v313 = vunpack.c.l.b16 %v92
    %v314 = vunpack.c.h.b16 %v92
    %v315 = vunpack.c.l.b16 %v93
    %v316 = vunpack.c.h.b16 %v93
    %v317 = vunpack.c.l.b16 %v94
    %v318 = vunpack.c.h.b16 %v94
    %v319 = vunpack.c.l.b16 %v95
    %v320 = vunpack.c.h.b16 %v95
    %v321 = vunpack.c.l.b16 %v96
    %v322 = vunpack.c.h.b16 %v96
    %v323 = vunpack.c.l.b16 %v97
    %v324 = vunpack.c.h.b16 %v97
    %v325 = vunpack.c.l.b16 %v98
    %v326 = vunpack.c.h.b16 %v98
    %v327 = vunpack.c.l.b16 %v99
    %v328 = vunpack.c.h.b16 %v99
    %v329 = vunpack.c.l.b16 %v100
    %v330 = vunpack.c.h.b16 %v100
    %v331 = vunpack.c.l.b16 %v101
    %v332 = vunpack.c.h.b16 %v101
    %v333 = vunpack.c.l.b16 %v102
    %v334 = vunpack.c.h.b16 %v102
    %v335 = vunpack.c.l.b16 %v103
    %v336 = vunpack.c.h.b16 %v103
    %v337 = vunpack.c.l.b16 %v104
    %v338 = vunpack.c.h.b16 %v104
    %v339 = vunpack.c.l.b16 %v105
    %v340 = vunpack.c.h.b16 %v105
    %v341 = vunpack.c.l.b16 %v106
    %v342 = vunpack.c.h.b16 %v106
    %v343 = vunpack.c.l.b16 %v107
    %v344 = vunpack.c.h.b16 %v107
    %v345 = vunpack.c.l.b16 %v108
    %v346 = vunpack.c.h.b16 %v108
    %v347 = vunpack.c.l.b16 %v109
    %v348 = vunpack.c.h.b16 %v109
    %v349 = vunpack.c.l.b16 %v110
    %v350 = vunpack.c.h.b16 %v110
    %v351 = vunpack.c.l.b16 %v111
    %v352 = vunpack.c.h.b16 %v111
    %v353 = vunpack.c.l.b16 %v112
    %v354 = vunpack.c.h.b16 %v112
    %v355 = vunpack.c.l.b16 %v113
    %v356 = vunpack.c.h.b16 %v113
    %v357 = vunpack.c.l.b16 %v114
    %v358 = vunpack.c.h.b16 %v114
    %v359 = vunpack.c.l.b16 %v115
    %v360 = vunpack.c.h.b16 %v115
    %v361 = vunpack.c.l.b16 %v116
    %v362 = vunpack.c.h.b16 %v116
    %v363 = vunpack.c.l.b16 %v117
    %v364 = vunpack.c.h.b16 %v117
    %v365 = vunpack.c.l.b16 %v118
    %v366 = vunpack.c.h.b16 %v118
    %v367 = vunpack.c.l.b16 %v119
    %v368 = vunpack.c.h.b16 %v119
    %v369 = vunpack.c.l.b16 %v120
    %v370 = vunpack.c.h.b16 %v120
    %v371 = vunpack.c.l.b16 %v121
    %v372 = vunpack.c.h.b16 %v121
    %v373 = vunpack.c.l.b16 %v122
    %v374 = vunpack.c.h.b16 %v122
    %v375 = vunpack.c.l.b16 %v123
    %v376 = vunpack.c.h.b16 %v123
    %v377 = vunpack.c.l.b16 %v124
    %v378 = vunpack.c.h.b16 %v124
    %v379 = vunpack.c.l.b16 %v125
    %v380 = vunpack.c.h.b16 %v125
    %v381 = vunpack.c.l.b16 %v126
    %v382 = vunpack.c.h.b16 %v126
    %v383 = vunpack.c.l.b16 %v127
    %v384 = vunpack.c.h.b16 %v127
    %v385 = vunpack.c.l.b16 %v128
    %v386 = vunpack.c.h.b16 %v128
    %v387 = vunpack.c.l.b16 %v129
    %v388 = vunpack.c.h.b16 %v129
    %v389 = vunpack.c.l.b16 %v130
    %v390 = vunpack.c.h.b16 %v130
    %v391 = vunpack.c.l.b16 %v131
    %v392 = vunpack.c.h.b16 %v131
    %v393 = vunpack.c.l.b16 %v132
    %v394 = vunpack.c.h.b16 %v132
    %v395 = vunpack.c.l.b16 %v133
    %v396 = vunpack.c.h.b16 %v133
    %v397 = vunpack.c.l.b16 %v134
    %v398 = vunpack.c.h.b16 %v134
    %v399 = vunpack.c.l.b16 %v135
    %v400 = vunpack.c.h.b16 %v135
    %v401 = vunpack.c.l.b16 %v136
    %v402 = vunpack.c.h.b16 %v136
    %v403 = vunpack.c.l.b16 %v137
    %v404 = vunpack.c.h.b16 %v137
    %v405 = vunpack.c.l.b16 %v138
    %v406 = vunpack.c.h.b16 %v138
    %v407 = vunpack.c.l.b16 %v139
    %v408 = vunpack.c.h.b16 %v139
    %v409 = vunpack.c.l.b16 %v140
    %v410 = vunpack.c.h.b16 %v140
    %v411 = vunpack.c.l.b16 %v141
    %v412 = vunpack.c.h.b16 %v141
    %v413 = vunpack.c.l.b16 %v142
    %v414 = vunpack.c.h.b16 %v142
    %v415 = vunpack.c.l.b16 %v143
    %v416 = vunpack.c.h.b16 %v143
    %v417 = vunpack.c.l.b16 %v144
    %v418 = vunpack.c.h.b16 %v144
    %v419 = vunpack.c.l.b16 %v145
    %v420 = vunpack.c.h.b16 %v145
    %v421 = vunpack.c.l.b16 %v146
    %v422 = vunpack.c.h.b16 %v146
    %v423 = vunpack.c.l.b16 %v147
    %v424 = vunpack.c.h.b16 %v147
    %v425 = vpack.c.b16 %v301, %v297
    %v426 = vpack.c.b16 %v302, %v298
    %v427 = vpack.c.b16 %v303, %v299
    %v428 = vpack.c.b16 %v304, %v300
    %v429 = vpack.c.b16 %v309, %v305
    %v430 = vpack.c.b16 %v310, %v306
    %v431 = vpack.c.b16 %v311, %v307
    %v432 = vpack.c.b16 %v312, %v308
    %v433 = vpack.c.b16 %v317, %v313
    %v434 = vpack.c.b16 %v318, %v314
    %v435 = vpack.c.b16 %v319, %v315
    %v436 = vpack.c.b16 %v320, %v316
    %v437 = vpack.c.b16 %v325, %v321
    %v438 = vpack.c.b16 %v326, %v322
    %v439 = vpack.c.b16 %v327, %v323
    %v440 = vpack.c.b16 %v328, %v324
    %v441 = vpack.c.b16 %v333, %v329
    %v442 = vpack.c.b16 %v334, %v330
    %v443 = vpack.c.b16 %v335, %v331
    %v444 = vpack.c.b16 %v336, %v332
    %v445 = vpack.c.b16 %v341, %v337
    %v446 = vpack.c.b16 %v342, %v338
    %v447 = vpack.c.b16 %v343, %v339
    %v448 = vpack.c.b16 %v344, %v340
    %v449 = vpack.c.b16 %v349, %v345
    %v450 = vpack.c.b16 %v350, %v346
    %v451 = vpack.c.b16 %v351, %v347
    %v452 = vpack.c.b16 %v352, %v348
    %v453 = vpack.c.b16 %v357, %v353
    %v454 = vpack.c.b16 %v358, %v354
    %v455 = vpack.c.b16 %v359, %v355
    %v456 = vpack.c.b16 %v360, %v356
    %v457 = vpack.c.b16 %v365, %v361
    %v458 = vpack.c.b16 %v366, %v362
    %v459 = vpack.c.b16 %v367, %v363
    %v460 = vpack.c.b16 %v368, %v364
    %v461 = vpack.c.b16 %v373, %v369
    %v462 = vpack.c.b16 %v374, %v370
    %v463 = vpack.c.b16 %v375, %v371
    %v464 = vpack.c.b16 %v376, %v372
    %v465 = vpack.c.b16 %v381, %v377
    %v466 = vpack.c.b16 %v382, %v378
    %v467 = vpack.c.b16 %v383, %v379
    %v468 = vpack.c.b16 %v384, %v380
    %v469 = vpack.c.b16 %v389, %v385
    %v470 = vpack.c.b16 %v390, %v386
    %v471 = vpack.c.b16 %v391, %v387
    %v472 = vpack.c.b16 %v392, %v388
    %v473 = vpack.c.b16 %v397, %v393
    %v474 = vpack.c.b16 %v398, %v394
    %v475 = vpack.c.b16 %v399, %v395
    %v476 = vpack.c.b16 %v400, %v396
    %v477 = vpack.c.b16 %v405, %v401
    %v478 = vpack.c.b16 %v406, %v402
    %v479 = vpack.c.b16 %v407, %v403
    %v480 = vpack.c.b16 %v408, %v404
    %v481 = vpack.c.b16 %v413, %v409
    %v482 = vpack.c.b16 %v414, %v410
    %v483 = vpack.c.b16 %v415, %v411
    %v484 = vpack.c.b16 %v416, %v412
    %v485 = vpack.c.b16 %v421, %v417
    %v486 = vpack.c.b16 %v422, %v418
    %v487 = vpack.c.b16 %v423, %v419
    %v488 = vpack.c.b16 %v424, %v420
    %553 = vmatpush.bf16.msra.mxu0 %v453
    %554 = vmatpush.bf16.msra.mxu0 %v449
    %555 = vmatpush.bf16.msra.mxu0 %v445
    %556 = vmatpush.bf16.msra.mxu0 %v441
    %557 = vmatpush.bf16.msra.mxu0 %v437
    %558 = vmatpush.bf16.msra.mxu0 %v433
    %559 = vmatpush.bf16.msra.mxu0 %v429
    %560 = vmatpush.bf16.msra.mxu0 %v425
    %561 = vmatmul.bf16.gmra.mxu0 %v229
    %v562 = vpop.f32.mrf.mxu0
    %v563 = vadd.f32 %v215, %v562
    %v564 = vpop.f32.mrf.mxu0
    %v565 = vadd.f32 %v215, %v564
    %566 = vdwg.mxu0
    %567 = vmatpush.bf16.msra.mxu0 %v485
    %568 = vmatpush.bf16.msra.mxu0 %v481
    %569 = vmatpush.bf16.msra.mxu0 %v477
    %570 = vmatpush.bf16.msra.mxu0 %v473
    %571 = vmatpush.bf16.msra.mxu0 %v469
    %572 = vmatpush.bf16.msra.mxu0 %v465
    %573 = vmatpush.bf16.msra.mxu0 %v461
    %574 = vmatpush.bf16.msra.mxu0 %v457
    %575 = vmatmul.bf16.gmra.mxu0 %v230
    %v576 = vpop.f32.mrf.mxu0
    %v577 = vadd.f32 %v563, %v576
    %v578 = vpop.f32.mrf.mxu0
    %v579 = vadd.f32 %v565, %v578
    %580 = vdwg.mxu0
    %581 = vmatpush.bf16.msra.mxu0 %v454
    %582 = vmatpush.bf16.msra.mxu0 %v450
    %583 = vmatpush.bf16.msra.mxu0 %v446
    %584 = vmatpush.bf16.msra.mxu0 %v442
    %585 = vmatpush.bf16.msra.mxu0 %v438
    %586 = vmatpush.bf16.msra.mxu0 %v434
    %587 = vmatpush.bf16.msra.mxu0 %v430
    %588 = vmatpush.bf16.msra.mxu0 %v426
    %589 = vmatmul.bf16.gmra.mxu0 %v229
    %v590 = vpop.f32.mrf.mxu0
    %v591 = vadd.f32 %v216, %v590
    %v592 = vpop.f32.mrf.mxu0
    %v593 = vadd.f32 %v216, %v592
    %594 = vdwg.mxu0
    %595 = vmatpush.bf16.msra.mxu0 %v486
    %596 = vmatpush.bf16.msra.mxu0 %v482
    %597 = vmatpush.bf16.msra.mxu0 %v478
    %598 = vmatpush.bf16.msra.mxu0 %v474
    %599 = vmatpush.bf16.msra.mxu0 %v470
    %600 = vmatpush.bf16.msra.mxu0 %v466
    %601 = vmatpush.bf16.msra.mxu0 %v462
    %602 = vmatpush.bf16.msra.mxu0 %v458
    %603 = vmatmul.bf16.gmra.mxu0 %v230
    %v604 = vpop.f32.mrf.mxu0
    %v605 = vadd.f32 %v591, %v604
    %v606 = vpop.f32.mrf.mxu0
    %v607 = vadd.f32 %v593, %v606
    %608 = vdwg.mxu0
    %609 = vmatpush.bf16.msra.mxu0 %v455
    %610 = vmatpush.bf16.msra.mxu0 %v451
    %611 = vmatpush.bf16.msra.mxu0 %v447
    %612 = vmatpush.bf16.msra.mxu0 %v443
    %613 = vmatpush.bf16.msra.mxu0 %v439
    %614 = vmatpush.bf16.msra.mxu0 %v435
    %615 = vmatpush.bf16.msra.mxu0 %v431
    %616 = vmatpush.bf16.msra.mxu0 %v427
    %617 = vmatmul.bf16.gmra.mxu0 %v229
    %v618 = vpop.f32.mrf.mxu0
    %v619 = vadd.f32 %v217, %v618
    %v620 = vpop.f32.mrf.mxu0
    %v621 = vadd.f32 %v217, %v620
    %622 = vdwg.mxu0
    %623 = vmatpush.bf16.msra.mxu0 %v487
    %624 = vmatpush.bf16.msra.mxu0 %v483
    %625 = vmatpush.bf16.msra.mxu0 %v479
    %626 = vmatpush.bf16.msra.mxu0 %v475
    %627 = vmatpush.bf16.msra.mxu0 %v471
    %628 = vmatpush.bf16.msra.mxu0 %v467
    %629 = vmatpush.bf16.msra.mxu0 %v463
    %630 = vmatpush.bf16.msra.mxu0 %v459
    %631 = vmatmul.bf16.gmra.mxu0 %v230
    %v632 = vpop.f32.mrf.mxu0
    %v633 = vadd.f32 %v619, %v632
    %v634 = vpop.f32.mrf.mxu0
    %v635 = vadd.f32 %v621, %v634
    %636 = vdwg.mxu0
    %637 = vmatpush.bf16.msra.mxu0 %v456
    %638 = vmatpush.bf16.msra.mxu0 %v452
    %639 = vmatpush.bf16.msra.mxu0 %v448
    %640 = vmatpush.bf16.msra.mxu0 %v444
    %641 = vmatpush.bf16.msra.mxu0 %v440
    %642 = vmatpush.bf16.msra.mxu0 %v436
    %643 = vmatpush.bf16.msra.mxu0 %v432
    %644 = vmatpush.bf16.msra.mxu0 %v428
    %645 = vmatmul.bf16.gmra.mxu0 %v229
    %v646 = vpop.f32.mrf.mxu0
    %v647 = vadd.f32 %v218, %v646
    %v648 = vpop.f32.mrf.mxu0
    %v649 = vadd.f32 %v218, %v648
    %650 = vdwg.mxu0
    %651 = vmatpush.bf16.msra.mxu0 %v488
    %652 = vmatpush.bf16.msra.mxu0 %v484
    %653 = vmatpush.bf16.msra.mxu0 %v480
    %654 = vmatpush.bf16.msra.mxu0 %v476
    %655 = vmatpush.bf16.msra.mxu0 %v472
    %656 = vmatpush.bf16.msra.mxu0 %v468
    %657 = vmatpush.bf16.msra.mxu0 %v464
    %658 = vmatpush.bf16.msra.mxu0 %v460
    %659 = vmatmul.bf16.gmra.mxu0 %v230
    %v660 = vpop.f32.mrf.mxu0
    %v661 = vadd.f32 %v647, %v660
    %v662 = vpop.f32.mrf.mxu0
    %v663 = vadd.f32 %v649, %v662
    %664 = vdwg.mxu0
    %vm665 = vcmp.ge.f32.partialorder %v577, 0.0
    %vm666 = vcmp.ge.f32.partialorder %v605, 0.0
    %vm667 = vcmp.ge.f32.partialorder %v633, 0.0
    %vm668 = vcmp.ge.f32.partialorder %v661, 0.0
    %vm669 = vcmp.ge.f32.partialorder %v579, 0.0
    %vm670 = vcmp.ge.f32.partialorder %v607, 0.0
    %vm671 = vcmp.ge.f32.partialorder %v635, 0.0
    %vm672 = vcmp.ge.f32.partialorder %v663, 0.0
    %v673 = vmul.f32 %v577, 0.01
    %v674 = vmul.f32 %v605, 0.01
    %v675 = vmul.f32 %v633, 0.01
    %v676 = vmul.f32 %v661, 0.01
    %v677 = vmul.f32 %v579, 0.01
    %v678 = vmul.f32 %v607, 0.01
    %v679 = vmul.f32 %v635, 0.01
    %v680 = vmul.f32 %v663, 0.01
    %v681 = vsel %vm665, %v577, %v673
    %v682 = vsel %vm666, %v605, %v674
    %v683 = vsel %vm667, %v633, %v675
    %v684 = vsel %vm668, %v661, %v676
    %v685 = vsel %vm669, %v579, %v677
    %v686 = vsel %vm670, %v607, %v678
    %v687 = vsel %vm671, %v635, %v679
    %v688 = vsel %vm672, %v663, %v680
    %v689 = vpack.c.bf16 %v685, %v681
    %v690 = vpack.c.bf16 %v686, %v682
    %v691 = vpack.c.bf16 %v687, %v683
    %v692 = vpack.c.bf16 %v688, %v684
    %v694 = vperm.slane %v213, 0
    %v760 = vunpack.c.l.b16 %v149
    %v761 = vunpack.c.l.b16 %v150
    %v762 = vunpack.c.l.b16 %v151
    %v763 = vunpack.c.l.b16 %v152
    %v764 = vunpack.c.l.b16 %v153
    %v765 = vunpack.c.l.b16 %v154
    %v766 = vunpack.c.l.b16 %v155
    %v767 = vunpack.c.l.b16 %v156
    %v768 = vunpack.c.l.b16 %v157
    %v769 = vunpack.c.l.b16 %v158
    %v770 = vunpack.c.l.b16 %v159
    %v771 = vunpack.c.l.b16 %v160
    %v772 = vunpack.c.l.b16 %v161
    %v773 = vunpack.c.l.b16 %v162
    %v774 = vunpack.c.l.b16 %v163
    %v775 = vunpack.c.l.b16 %v164
    %v776 = vunpack.c.l.b16 %v165
    %v777 = vunpack.c.l.b16 %v166
    %v778 = vunpack.c.l.b16 %v167
    %v779 = vunpack.c.l.b16 %v168
    %v780 = vunpack.c.l.b16 %v169
    %v781 = vunpack.c.l.b16 %v170
    %v782 = vunpack.c.l.b16 %v171
    %v783 = vunpack.c.l.b16 %v172
    %v784 = vunpack.c.l.b16 %v173
    %v785 = vunpack.c.l.b16 %v174
    %v786 = vunpack.c.l.b16 %v175
    %v787 = vunpack.c.l.b16 %v176
    %v788 = vunpack.c.l.b16 %v177
    %v789 = vunpack.c.l.b16 %v178
    %v790 = vunpack.c.l.b16 %v179
    %v791 = vunpack.c.l.b16 %v180
    %v792 = vunpack.c.l.b16 %v181
    %v793 = vunpack.c.l.b16 %v182
    %v794 = vunpack.c.l.b16 %v183
    %v795 = vunpack.c.l.b16 %v184
    %v796 = vunpack.c.l.b16 %v185
    %v797 = vunpack.c.l.b16 %v186
    %v798 = vunpack.c.l.b16 %v187
    %v799 = vunpack.c.l.b16 %v188
    %v800 = vunpack.c.l.b16 %v189
    %v801 = vunpack.c.l.b16 %v190
    %v802 = vunpack.c.l.b16 %v191
    %v803 = vunpack.c.l.b16 %v192
    %v804 = vunpack.c.l.b16 %v193
    %v805 = vunpack.c.l.b16 %v194
    %v806 = vunpack.c.l.b16 %v195
    %v807 = vunpack.c.l.b16 %v196
    %v808 = vunpack.c.l.b16 %v197
    %v809 = vunpack.c.l.b16 %v198
    %v810 = vunpack.c.l.b16 %v199
    %v811 = vunpack.c.l.b16 %v200
    %v812 = vunpack.c.l.b16 %v201
    %v813 = vunpack.c.l.b16 %v202
    %v814 = vunpack.c.l.b16 %v203
    %v815 = vunpack.c.l.b16 %v204
    %v816 = vunpack.c.l.b16 %v205
    %v817 = vunpack.c.l.b16 %v206
    %v818 = vunpack.c.l.b16 %v207
    %v819 = vunpack.c.l.b16 %v208
    %v820 = vunpack.c.l.b16 %v209
    %v821 = vunpack.c.l.b16 %v210
    %v822 = vunpack.c.l.b16 %v211
    %v823 = vunpack.c.l.b16 %v212
    %v824 = vpack.c.b16 %v761, %v760
    %v825 = vpack.c.b16 %v763, %v762
    %v826 = vpack.c.b16 %v765, %v764
    %v827 = vpack.c.b16 %v767, %v766
    %v828 = vpack.c.b16 %v769, %v768
    %v829 = vpack.c.b16 %v771, %v770
    %v830 = vpack.c.b16 %v773, %v772
    %v831 = vpack.c.b16 %v775, %v774
    %v832 = vpack.c.b16 %v777, %v776
    %v833 = vpack.c.b16 %v779, %v778
    %v834 = vpack.c.b16 %v781, %v780
    %v835 = vpack.c.b16 %v783, %v782
    %v836 = vpack.c.b16 %v785, %v784
    %v837 = vpack.c.b16 %v787, %v786
    %v838 = vpack.c.b16 %v789, %v788
    %v839 = vpack.c.b16 %v791, %v790
    %v840 = vpack.c.b16 %v793, %v792
    %v841 = vpack.c.b16 %v795, %v794
    %v842 = vpack.c.b16 %v797, %v796
    %v843 = vpack.c.b16 %v799, %v798
    %v844 = vpack.c.b16 %v801, %v800
    %v845 = vpack.c.b16 %v803, %v802
    %v846 = vpack.c.b16 %v805, %v804
    %v847 = vpack.c.b16 %v807, %v806
    %v848 = vpack.c.b16 %v809, %v808
    %v849 = vpack.c.b16 %v811, %v810
    %v850 = vpack.c.b16 %v813, %v812
    %v851 = vpack.c.b16 %v815, %v814
    %v852 = vpack.c.b16 %v817, %v816
    %v853 = vpack.c.b16 %v819, %v818
    %v854 = vpack.c.b16 %v821, %v820
    %v855 = vpack.c.b16 %v823, %v822
    %888 = vmatpush.bf16.msra.mxu0 %v831
    %889 = vmatpush.bf16.msra.mxu0 %v830
    %890 = vmatpush.bf16.msra.mxu0 %v829
    %891 = vmatpush.bf16.msra.mxu0 %v828
    %892 = vmatpush.bf16.msra.mxu0 %v827
    %893 = vmatpush.bf16.msra.mxu0 %v826
    %894 = vmatpush.bf16.msra.mxu0 %v825
    %895 = vmatpush.bf16.msra.mxu0 %v824
    %896 = vmatmul.bf16.gmra.mxu0 %v689
    %v897 = vpop.f32.mrf.mxu0
    %v898 = vadd.f32 %v694, %v897
    %v899 = vpop.f32.mrf.mxu0
    %v900 = vadd.f32 %v694, %v899
    %901 = vdwg.mxu0
    %902 = vmatpush.bf16.msra.mxu0 %v839
    %903 = vmatpush.bf16.msra.mxu0 %v838
    %904 = vmatpush.bf16.msra.mxu0 %v837
    %905 = vmatpush.bf16.msra.mxu0 %v836
    %906 = vmatpush.bf16.msra.mxu0 %v835
    %907 = vmatpush.bf16.msra.mxu0 %v834
    %908 = vmatpush.bf16.msra.mxu0 %v833
    %909 = vmatpush.bf16.msra.mxu0 %v832
    %910 = vmatmul.bf16.gmra.mxu0 %v690
    %v911 = vpop.f32.mrf.mxu0
    %v912 = vadd.f32 %v898, %v911
    %v913 = vpop.f32.mrf.mxu0
    %v914 = vadd.f32 %v900, %v913
    %915 = vdwg.mxu0
    %916 = vmatpush.bf16.msra.mxu0 %v847
    %917 = vmatpush.bf16.msra.mxu0 %v846
    %918 = vmatpush.bf16.msra.mxu0 %v845
    %919 = vmatpush.bf16.msra.mxu0 %v844
    %920 = vmatpush.bf16.msra.mxu0 %v843
    %921 = vmatpush.bf16.msra.mxu0 %v842
    %922 = vmatpush.bf16.msra.mxu0 %v841
    %923 = vmatpush.bf16.msra.mxu0 %v840
    %924 = vmatmul.bf16.gmra.mxu0 %v691
    %v925 = vpop.f32.mrf.mxu0
    %v926 = vadd.f32 %v912, %v925
    %v927 = vpop.f32.mrf.mxu0
    %v928 = vadd.f32 %v914, %v927
    %929 = vdwg.mxu0
    %930 = vmatpush.bf16.msra.mxu0 %v855
    %931 = vmatpush.bf16.msra.mxu0 %v854
    %932 = vmatpush.bf16.msra.mxu0 %v853
    %933 = vmatpush.bf16.msra.mxu0 %v852
    %934 = vmatpush.bf16.msra.mxu0 %v851
    %935 = vmatpush.bf16.msra.mxu0 %v850
    %936 = vmatpush.bf16.msra.mxu0 %v849
    %937 = vmatpush.bf16.msra.mxu0 %v848
    %938 = vmatmul.bf16.gmra.mxu0 %v692
    %v939 = vpop.f32.mrf.mxu0
    %v940 = vadd.f32 %v926, %v939
    %v941 = vpop.f32.mrf.mxu0
    %v942 = vadd.f32 %v928, %v941
    %943 = vdwg.mxu0
    %944 = vst [vmem:[#allocation10] sm:$0xff] %v940
    %945 = vst [vmem:[#allocation10 + $0x8] sm:$0xff] %v942
    // Predicated region
    $region38: #{tpu_custom_call.1} parent=1 // pred_check
      _
    $region39: #{tpu_custom_call.1} parent=1 // pred_check_branch
      %947 = sbr.rel (0) target = $region41
    $region40: #{tpu_custom_call.1} parent=1 // pred_region
      %949 = vsyncadd [#allocation4], 0
      %s950 = sshll.u32 [#allocation10], 4
      %s951 = int_to_ptr.vmem [resolvable:$true] %s950
      %s952 = sshll.u32 %s5, 4
      %s953 = int_to_ptr.hbm [resolvable:$true] %s952
      %958 = dma.vmem_to_hbm [thread:$0]  %s951, 256, %s953, [#allocation4], 128, 128, 8
    $region41: #{tpu_custom_call.1} parent=1 // pred_fallthru
      _
    // Predicated region
    $region42: #{tpu_custom_call.1} parent=1 // pred_check
      _
    $region43: #{tpu_custom_call.1} parent=1 // pred_check_branch
      %960 = sbr.rel (0) target = $region45
    $region44: #{tpu_custom_call.1} parent=1 // pred_region
      %962 = dma.done [#allocation4], 256
    $region45: #{tpu_custom_call.1} parent=1 // pred_fallthru
      _
    %963 = vsyncpa [#allocation3], 1
    %964 = vsyncpa [#allocation6], 1
    %965 = vsyncpa [#allocation9], 1
    %966 = vsyncpa [#allocation4], 1

</llo_original>
